<compile_context>
chip_gen: v7x
topology: tpu7x:2x2x1
jax: 0.10.0
libtpu: 0.0.40
codegen_flags: <defaults>
</compile_context>

<pallas_src>
import jax
import jax.numpy as jnp
from jax import lax
from jax.experimental import pallas as pl
from jax.experimental.pallas import tpu as pltpu


def _fused_matmul_kernel(x1t_ref, v3_ref, o_ref):
    """o[i,j] (+)= x1t_block.T @ v3_block, accumulating over the K grid axis."""
    k = pl.program_id(2)
    part = lax.dot_general(
        x1t_ref[...], v3_ref[...],
        dimension_numbers=(((0,), (0,)), ((), ())),   # contract dim 0 of both
        preferred_element_type=jnp.float32,
    )

    @pl.when(k == 0)
    def _first():
        o_ref[...] = part

    @pl.when(k != 0)
    def _accum():
        o_ref[...] += part


def _largest_divisor_tile(dim, candidates):
    for c in candidates:
        if dim % c == 0:
            return c
    return dim  # full-extent block is always a legal TPU block shape


def _pick_tiles(M, E, K, budget_bytes, elem_bytes):
    tm = _largest_divisor_tile(M, (256, 128))
    te = _largest_divisor_tile(E, (256, 128))
    tk = K
    for cand in (2048, 1024, 512, 256, 128):
        if K % cand == 0:
            in_bytes = 2 * elem_bytes * cand * (tm + te)   # double-buffered inputs
            out_bytes = 2 * 4 * tm * te                    # f32 output block
            if in_bytes + out_bytes <= budget_bytes:
                tk = cand
                break
    # Expose >=2 parallel output blocks (keeps v7x's 2nd TC busy; near-free on
    # single-TC v5e/v6e). Only split when the halves still satisfy (8,128).
    if (M // tm) * (E // te) == 1:
        if tm >= 256 and (tm // 2) % 128 == 0:
            tm //= 2
        elif te >= 256 and (te // 2) % 128 == 0:
            te //= 2
    return tm, te, tk


def model_forward(x1, x2, use_bf16=False):
    A, B, C = x1.shape
    D, E, F = x2.shape
    assert A - 2 == D, "matmul contraction requires A - 2 == D"
    assert F >= 6, "v2[5:6] requires F >= 6"

    # Layout-only glue (no transposes materialized):
    #   t1 = permute(x1,(2,0,1))[1:,2:,0]  ==  x1[2:, 0, 1:].T
    #   v2[f] = permute(x2,(2,0,1))[f]     ==  x2[:, :, f]
    x1t = x1[2:, 0, 1:]                               # (K, M), LHS in transposed layout
    v3 = x2[:, :, 0] * x2[:, :, 2] * x2[:, :, 5]      # (K, E), single fused XLA pass
    if use_bf16:
        x1t = x1t.astype(jnp.bfloat16)
        v3 = v3.astype(jnp.bfloat16)
    K, M = x1t.shape
    elem_bytes = jnp.dtype(x1t.dtype).itemsize

    # VMEM budget (v7x has only 64 MiB physical VMEM per TC; stay conservative).
    try:
        vmem_cap = int(pltpu.get_tpu_info().vmem_capacity_bytes)
    except Exception:
        vmem_cap = 64 << 20
    budget = min(24 << 20, (vmem_cap * 3) // 8)

    tm, te, tk = _pick_tiles(M, E, K, budget, elem_bytes)
    grid = (M // tm, E // te, K // tk)

    vmem_needed = 2 * elem_bytes * tk * (tm + te) + 2 * 4 * tm * te
    vmem_limit = int(min(vmem_cap, max(vmem_needed + (8 << 20), 32 << 20)))

    # Honest traffic estimate: x1t is re-streamed per E tile, v3 per M tile.
    cost = pl.CostEstimate(
        flops=2 * M * K * E,
        transcendentals=0,
        bytes_accessed=(elem_bytes * ((E // te) * K * M + (M // tm) * K * E)
                        + 4 * M * E),
    )

    out2d = pl.pallas_call(
        _fused_matmul_kernel,
        out_shape=jax.ShapeDtypeStruct((M, E), jnp.float32),
        grid_spec=pltpu.PrefetchScalarGridSpec(
            num_scalar_prefetch=0,
            grid=grid,
            in_specs=[
                pl.BlockSpec((tk, tm), lambda i, j, k: (k, i)),   # x1t (trans-LHS)
                pl.BlockSpec((tk, te), lambda i, j, k: (k, j)),   # v3
            ],
            out_specs=pl.BlockSpec((tm, te), lambda i, j, k: (i, j)),
        ),
        compiler_params=pltpu.CompilerParams(
            dimension_semantics=("parallel", "parallel", "arbitrary"),
            vmem_limit_bytes=vmem_limit,
        ),
        cost_estimate=cost,
    )(x1t, v3)

    # torch.matmul((M, K), (1, K, E)) broadcasts to (1, M, E): free reshape.
    return out2d.reshape(1, M, E)


def reference(x1, x2):
    # Pure-JAX reference mirroring the PyTorch forward exactly (f32 matmul).
    t1 = jnp.transpose(x1, (2, 0, 1))[1:, 2:, 0]
    v2 = jnp.transpose(x2, (2, 0, 1))
    v3 = v2[0:1] * v2[2:3] * v2[5:6]
    return jnp.matmul(t1, v3, precision=lax.Precision.HIGHEST)


if __name__ == "__main__":
    key = jax.random.PRNGKey(0)
    k1, k2, k3, k4 = jax.random.split(key, 4)

    # Small shapes consistent with the forward pass:
    #   x1: (A=10, B=3, C=9) -> t1 (M=8, K=8);  x2: (D=8, E=16, F=8) -> v3 (1, 8, 16)
    x1 = jax.random.normal(k1, (10, 3, 9), dtype=jnp.float32)
    x2 = jax.random.normal(k2, (8, 16, 8), dtype=jnp.float32)
    out = jax.block_until_ready(model_forward(x1, x2))
    ref = reference(x1, x2)
    assert out.shape == (1, 8, 16), out.shape
    assert jnp.allclose(out, ref, atol=1e-5, rtol=1e-5), "small-shape mismatch vs reference"

    # Larger case exercising the tiled (M, E, K) grid + resident f32 accumulation:
    #   x1: (1026, 2, 257) -> t1 (M=256, K=1024);  x2: (1024, 256, 8) -> E=256
    x1b = jax.random.normal(k3, (1026, 2, 257), dtype=jnp.float32)
    x2b = jax.random.normal(k4, (1024, 256, 8), dtype=jnp.float32)
    outb = jax.block_until_ready(model_forward(x1b, x2b))
    refb = reference(x1b, x2b)
    assert outb.shape == (1, 256, 256), outb.shape
    assert jnp.allclose(outb, refb, atol=1e-3, rtol=1e-3), "tiled-shape mismatch vs reference"

    print("KERNEL_OK")
</pallas_src>

<mosaic_0001>
module attributes {stable_mosaic.version = 11 : i64} {
  func.func @_fused_matmul_kernel(%arg0: i32, %arg1: i32, %arg2: i32, %arg3: memref<8x8xf32, #tpu.memory_space<vmem>>, %arg4: memref<8x16xf32, #tpu.memory_space<vmem>>, %arg5: memref<8x16xf32, #tpu.memory_space<vmem>>) attributes {dimension_semantics = [#tpu.dimension_semantics<parallel>, #tpu.dimension_semantics<parallel>, #tpu.dimension_semantics<arbitrary>], iteration_bounds = array<i64: 1, 1, 1>, scalar_prefetch = 0 : i64, scratch_operands = 0 : i64, tpu.core_type = #tpu.core_type<tc>, window_params = [{transform_indices = @transform_0, window_bounds = array<i64: 8, 8>}, {transform_indices = @transform_1, window_bounds = array<i64: 8, 16>}, {transform_indices = @transform_2, window_bounds = array<i64: 8, 16>}]} {
    %c0 = arith.constant 0 : index
    %c0_0 = arith.constant 0 : index
    %0 = vector.load %arg3[%c0, %c0_0] : memref<8x8xf32, #tpu.memory_space<vmem>>, vector<8x8xf32>
    %c0_1 = arith.constant 0 : index
    %c0_2 = arith.constant 0 : index
    %1 = vector.load %arg4[%c0_1, %c0_2] : memref<8x16xf32, #tpu.memory_space<vmem>>, vector<8x16xf32>
    %cst = arith.constant dense<0.000000e+00> : vector<8x16xf32>
    %2 = tpu.matmul %0, %1, %cst {dimension_numbers = #tpu.dot_dimension_numbers<[0], [0], [1], [1], [0, 1, 1, 1], [], []>} : vector<8x8xf32>, vector<8x16xf32>, vector<8x16xf32> -> vector<8x16xf32>
    %c0_i32 = arith.constant 0 : i32
    %3 = arith.cmpi eq, %arg2, %c0_i32 : i32
    %4 = arith.extui %3 : i1 to i32
    %c0_i32_3 = arith.constant 0 : i32
    %5 = arith.cmpi ne, %4, %c0_i32_3 : i32
    scf.if %5 {
      %c0_6 = arith.constant 0 : index
      %c0_7 = arith.constant 0 : index
      %9 = vector.load %arg5[%c0_6, %c0_7] : memref<8x16xf32, #tpu.memory_space<vmem>>, vector<8x16xf32>
      tpu.vector_store %arg5[%c0_6, %c0_7], %2 {strides = array<i32>} : memref<8x16xf32, #tpu.memory_space<vmem>>, vector<8x16xf32>,
    } else {
    }
    %c0_i32_4 = arith.constant 0 : i32
    %6 = arith.cmpi ne, %arg2, %c0_i32_4 : i32
    %7 = arith.extui %6 : i1 to i32
    %c0_i32_5 = arith.constant 0 : i32
    %8 = arith.cmpi ne, %7, %c0_i32_5 : i32
    scf.if %8 {
      %c0_6 = arith.constant 0 : index
      %c0_7 = arith.constant 0 : index
      %9 = vector.load %arg5[%c0_6, %c0_7] : memref<8x16xf32, #tpu.memory_space<vmem>>, vector<8x16xf32>
      %10 = arith.addf %9, %2 : vector<8x16xf32>
      %c0_8 = arith.constant 0 : index
      %c0_9 = arith.constant 0 : index
      %11 = vector.load %arg5[%c0_8, %c0_9] : memref<8x16xf32, #tpu.memory_space<vmem>>, vector<8x16xf32>
      tpu.vector_store %arg5[%c0_8, %c0_9], %10 {strides = array<i32>} : memref<8x16xf32, #tpu.memory_space<vmem>>, vector<8x16xf32>,
    } else {
    }
    return
  }
  func.func @transform_0(%arg0: i32, %arg1: i32, %arg2: i32) -> (i32, i32) {
    %c0_i32 = arith.constant 0 : i32
    return %arg2, %arg0 : i32, i32
  }
  func.func @transform_1(%arg0: i32, %arg1: i32, %arg2: i32) -> (i32, i32) {
    %c0_i32 = arith.constant 0 : i32
    return %arg2, %arg1 : i32, i32
  }
  func.func @transform_2(%arg0: i32, %arg1: i32, %arg2: i32) -> (i32, i32) {
    %c0_i32 = arith.constant 0 : i32
    return %arg0, %arg1 : i32, i32
  }
}

</mosaic_0001>

<llo_original>
// kernel: tpu_custom_call.1
$region0: #{tpu_custom_call.1}
  #allocation0 [shape = 'u32[]', space=smem, size = 0x4, offset = 0x4, fixed_abs, tag = 'smem constant byte address 0x4 - core index']
  #allocation1 [shape = 'u32[144,128]{1,0:T(1,128)}', space=vmem, size = 0x12000, scoped, tag = 'internal scratch']
  %s0 = inlined_call_operand.hbm [shape: f32[8,8], index: 0, kind: input, shape index: {}]
  %s1 = inlined_call_operand.hbm [shape: f32[8,16], index: 1, kind: input, shape index: {}]
  %s2 = inlined_call_operand.hbm [shape: f32[8,16], index: 2, kind: output, shape index: {}]
  %s3 = sld [smem:[#allocation0]]
  $region34: #{tpu_custom_call.1} parent=0
    _
  %s5 = ssub.s32 1, %s3
  %s6 = scalar_select 0, %s5, %s3
  $region1: #{tpu_custom_call.1} parent=0
    #allocation2 [shape = 'u8[4096]{0}', space=vmem, size = 0x1000, scoped, tag = 'input window, operand 0, single buffered']
    #allocation3 [shape = 's32[1]{0}', space=sflag, size = 0x4, scoped, tag = 'scoped memory for tpu_custom_call.1']
    #allocation4 [shape = 's32[1]{0}', space=sflag, size = 0x4, scoped, tag = 'scoped memory for tpu_custom_call.1']
    #allocation5 [shape = 'u8[4096]{0}', space=vmem, size = 0x1000, scoped, tag = 'input window, operand 1, single buffered']
    #allocation6 [shape = 's32[1]{0}', space=sflag, size = 0x4, scoped, tag = 'scoped memory for tpu_custom_call.1']
    #allocation7 [shape = 'u8[4096]{0}', space=vmem, size = 0x1000, scoped, tag = 'output window, operand 0, single buffered']
    %7 = vsyncpa [#allocation3], 0
    %8 = vsyncpa [#allocation6], 0
    %9 = vsyncpa [#allocation4], 0
    // Predicated region
    $region2: #{tpu_custom_call.1} parent=1 // pred_check
      _
    $region3: #{tpu_custom_call.1} parent=1 // pred_check_branch
      %11 = sbr.rel (0) target = $region5
    $region4: #{tpu_custom_call.1} parent=1 // pred_region
      %s13 = ssub.s32 128, 128
      %14 = vsyncadd [#allocation3], %s13
      %s16 = sshll.u32 [#allocation2], 4
      %s17 = int_to_ptr.vmem [resolvable:$true] %s16
      %19 = dma.hbm_to_vmem [thread:$0]  %s0, 128, %s17, [#allocation3]
    $region5: #{tpu_custom_call.1} parent=1 // pred_fallthru
      _
    // Predicated region
    $region6: #{tpu_custom_call.1} parent=1 // pred_check
      _
    $region7: #{tpu_custom_call.1} parent=1 // pred_check_branch
      %21 = sbr.rel (0) target = $region9
    $region8: #{tpu_custom_call.1} parent=1 // pred_region
      %s23 = ssub.s32 128, 128
      %24 = vsyncadd [#allocation6], %s23
      %s26 = sshll.u32 [#allocation5], 4
      %s27 = int_to_ptr.vmem [resolvable:$true] %s26
      %29 = dma.hbm_to_vmem [thread:$0]  %s1, 128, %s27, [#allocation6]
    $region9: #{tpu_custom_call.1} parent=1 // pred_fallthru
      _
    // Predicated region
    $region10: #{tpu_custom_call.1} parent=1 // pred_check
      _
    $region11: #{tpu_custom_call.1} parent=1 // pred_check_branch
      %31 = sbr.rel (0) target = $region13
    $region12: #{tpu_custom_call.1} parent=1 // pred_region
      %32 = dma.done [#allocation3], 128
    $region13: #{tpu_custom_call.1} parent=1 // pred_fallthru
      _
    // Predicated region
    $region14: #{tpu_custom_call.1} parent=1 // pred_check
      _
    $region15: #{tpu_custom_call.1} parent=1 // pred_check_branch
      %34 = sbr.rel (0) target = $region17
    $region16: #{tpu_custom_call.1} parent=1 // pred_region
      %35 = dma.done [#allocation6], 128
    $region17: #{tpu_custom_call.1} parent=1 // pred_fallthru
      _
    %v36 = vld [vmem:[#allocation2] sm:$0xff]
    %v37 = vld [vmem:[#allocation5] sm:$0xff]
    %38 = vxpose.xlu0.b32.start [1/16] %v36, 128
    %39 = vxpose.xlu0.b32.cont [2/16] 0.0, 128
    %40 = vxpose.xlu0.b32.cont [3/16] 0.0, 128
    %41 = vxpose.xlu0.b32.cont [4/16] 0.0, 128
    %42 = vxpose.xlu0.b32.cont [5/16] 0.0, 128
    %43 = vxpose.xlu0.b32.cont [6/16] 0.0, 128
    %44 = vxpose.xlu0.b32.cont [7/16] 0.0, 128
    %45 = vxpose.xlu0.b32.cont [8/16] 0.0, 128
    %46 = vxpose.xlu0.b32.cont [9/16] 0.0, 128
    %47 = vxpose.xlu0.b32.cont [10/16] 0.0, 128
    %48 = vxpose.xlu0.b32.cont [11/16] 0.0, 128
    %49 = vxpose.xlu0.b32.cont [12/16] 0.0, 128
    %50 = vxpose.xlu0.b32.cont [13/16] 0.0, 128
    %51 = vxpose.xlu0.b32.cont [14/16] 0.0, 128
    %52 = vxpose.xlu0.b32.cont [15/16] 0.0, 128
    %53 = vxpose.xlu0.b32.end [16/16] 0.0, 128
    %v54 = vpop.trf.xlu0
    %v55 = vpop.trf.xlu0
    %v56 = vpop.trf.xlu0
    %v57 = vpop.trf.xlu0
    %v58 = vpop.trf.xlu0
    %v59 = vpop.trf.xlu0
    %v60 = vpop.trf.xlu0
    %v61 = vpop.trf.xlu0
    %v62 = vpop.trf.xlu0
    %v63 = vpop.trf.xlu0
    %v64 = vpop.trf.xlu0
    %v65 = vpop.trf.xlu0
    %v66 = vpop.trf.xlu0
    %v67 = vpop.trf.xlu0
    %v68 = vpop.trf.xlu0
    %v69 = vpop.trf.xlu0
    %vm70 = vcmask 64512
    %v72 = vsel %vm70, %v54, 0
    %74 = vmatprep.subr.mxu0 0.0
    %75 = vmatpush1.msra.mxu0 %v37
    %76 = vmatprep.subr.mxu0 0.0
    %77 = vmatpush1.msra.mxu0 0.0
    %78 = vmatprep.subr.mxu0 0.0
    %79 = vmatpush1.msra.mxu0 0.0
    %80 = vmatprep.subr.mxu0 0.0
    %81 = vmatpush1.msra.mxu0 0.0
    %82 = vmatprep.subr.mxu0 0.0
    %83 = vmatpush1.msra.mxu0 0.0
    %84 = vmatprep.subr.mxu0 0.0
    %85 = vmatpush1.msra.mxu0 0.0
    %86 = vmatprep.subr.mxu0 0.0
    %87 = vmatpush1.msra.mxu0 0.0
    %88 = vmatprep.subr.mxu0 0.0
    %89 = vmatpush1.msra.mxu0 0.0
    %90 = vmatprep.subr.mxu0 0.0
    %91 = vmatpush1.msra.mxu0 0.0
    %92 = vmatprep.subr.mxu0 0.0
    %93 = vmatpush1.msra.mxu0 0.0
    %94 = vmatprep.subr.mxu0 0.0
    %95 = vmatpush1.msra.mxu0 0.0
    %96 = vmatprep.subr.mxu0 0.0
    %97 = vmatpush1.msra.mxu0 0.0
    %98 = vmatprep.subr.mxu0 0.0
    %99 = vmatpush1.msra.mxu0 0.0
    %100 = vmatprep.subr.mxu0 0.0
    %101 = vmatpush1.msra.mxu0 0.0
    %102 = vmatprep.subr.mxu0 0.0
    %103 = vmatpush1.msra.mxu0 0.0
    %104 = vmatprep.subr.mxu0 0.0
    %105 = vmatpush1.msra.mxu0 0.0
    %106 = vmatprep.subr.mxu0 0.0
    %107 = vmatpush1.msra.mxu0 0.0
    %108 = vmatprep.subr.mxu0 0.0
    %109 = vmatpush1.msra.mxu0 0.0
    %110 = vmatprep.subr.mxu0 0.0
    %111 = vmatpush1.msra.mxu0 0.0
    %112 = vmatprep.subr.mxu0 0.0
    %113 = vmatpush1.msra.mxu0 0.0
    %114 = vmatprep.subr.mxu0 0.0
    %115 = vmatpush1.msra.mxu0 0.0
    %116 = vmatprep.subr.mxu0 0.0
    %117 = vmatpush1.msra.mxu0 0.0
    %118 = vmatprep.subr.mxu0 0.0
    %119 = vmatpush1.msra.mxu0 0.0
    %120 = vmatprep.subr.mxu0 0.0
    %121 = vmatpush1.msra.mxu0 0.0
    %122 = vmatprep.subr.mxu0 0.0
    %123 = vmatpush1.msra.mxu0 0.0
    %124 = vmatprep.subr.mxu0 0.0
    %125 = vmatpush1.msra.mxu0 0.0
    %126 = vmatprep.subr.mxu0 0.0
    %127 = vmatpush1.msra.mxu0 0.0
    %128 = vmatprep.subr.mxu0 0.0
    %129 = vmatpush1.msra.mxu0 0.0
    %130 = vmatprep.subr.mxu0 0.0
    %131 = vmatpush1.msra.mxu0 0.0
    %132 = vmatprep.subr.mxu0 0.0
    %133 = vmatpush1.msra.mxu0 0.0
    %134 = vmatprep.subr.mxu0 0.0
    %135 = vmatpush1.msra.mxu0 0.0
    %136 = vmatprep.subr.mxu0 0.0
    %137 = vmatpush1.msra.mxu0 0.0
    %138 = vmatprep.mubr.f32.mxu0 0.0
    %139 = vmatmul.mubr.f32.gmra.mrb[0].mxu0 %v72
    %v140 = vpop.f32.mrb[0].mxu0
    %v141 = vadd.f32 0.0, %v140
    %v142 = vpop.f32.mrb[0].mxu0
    %143 = vdwg.mxu0
    %p144 = scmp.eq.s32.totalorder 0, 0
    // Predicated region
    $region18: #{tpu_custom_call.1} parent=1 // pred_check
      %p145 = pneg %p144
    $region19: #{tpu_custom_call.1} parent=1 // pred_check_branch
      %147 = sbr.rel (%p145) target = $region21
    $region20: #{tpu_custom_call.1} parent=1 // pred_region
      %vm148 = vcmask 130048
      %149 = vst.msk [vmem:[#allocation7] sm:$0xff] %vm148, %v141
    $region21: #{tpu_custom_call.1} parent=1 // pred_fallthru
      _
    %p150 = scmp.ne.s32.totalorder 0, 0
    // Predicated region
    $region22: #{tpu_custom_call.1} parent=1 // pred_check
      %p151 = pneg %p150
    $region23: #{tpu_custom_call.1} parent=1 // pred_check_branch
      %153 = sbr.rel (%p151) target = $region25
    $region24: #{tpu_custom_call.1} parent=1 // pred_region
      %v154 = vld [vmem:[#allocation7] sm:$0xff]
      %v155 = vadd.f32 %v154, %v141
      %vm156 = vcmask 130048
      %157 = vst.msk [vmem:[#allocation7] sm:$0xff] %vm156, %v155
    $region25: #{tpu_custom_call.1} parent=1 // pred_fallthru
      _
    // Predicated region
    $region26: #{tpu_custom_call.1} parent=1 // pred_check
      _
    $region27: #{tpu_custom_call.1} parent=1 // pred_check_branch
      %159 = sbr.rel (0) target = $region29
    $region28: #{tpu_custom_call.1} parent=1 // pred_region
      %s161 = ssub.s32 128, 128
      %162 = vsyncadd [#allocation4], %s161
      %s164 = sshll.u32 [#allocation7], 4
      %s165 = int_to_ptr.vmem [resolvable:$true] %s164
      %167 = dma.vmem_to_hbm [thread:$0]  %s165, 128, %s2, [#allocation4]
    $region29: #{tpu_custom_call.1} parent=1 // pred_fallthru
      _
    // Predicated region
    $region30: #{tpu_custom_call.1} parent=1 // pred_check
      _
    $region31: #{tpu_custom_call.1} parent=1 // pred_check_branch
      %169 = sbr.rel (0) target = $region33
    $region32: #{tpu_custom_call.1} parent=1 // pred_region
      %170 = dma.done [#allocation4], 128
    $region33: #{tpu_custom_call.1} parent=1 // pred_fallthru
      _
    %171 = vsyncpa [#allocation3], 1
    %172 = vsyncpa [#allocation6], 1
    %173 = vsyncpa [#allocation4], 1

</llo_original>
